<compile_context>
chip_gen: v5e
topology: v5e:2x2
jax: 0.10.0
libtpu: 0.0.40
codegen_flags: <defaults>
</compile_context>

<pallas_src>
import jax
import jax.numpy as jnp
from jax.experimental import pallas as pl
from jax.experimental.pallas import tpu as pltpu


def _tower_kernel(x_ref, w1_ref, b1_ref, w2_ref, b2_ref, w3_ref, b3_ref, o_ref):
    # Fused 3-layer MLP on one batch tile: matmuls on the MXU (bf16 in, f32
    # accum), bias + ReLU on the VPU in f32.
    x = x_ref[...]                                                     # (TM, in) bf16
    h1 = jnp.dot(x, w1_ref[...], preferred_element_type=jnp.float32) + b1_ref[...]
    h1 = jnp.maximum(h1, 0.0)                                          # f32
    h2 = jnp.dot(h1.astype(w2_ref.dtype), w2_ref[...],
                 preferred_element_type=jnp.float32) + b2_ref[...]
    h2 = jnp.maximum(h2, 0.0)                                          # f32
    out = jnp.dot(h2.astype(w3_ref.dtype), w3_ref[...],
                  preferred_element_type=jnp.float32) + b3_ref[...]
    o_ref[...] = out.astype(o_ref.dtype)                               # lane-dense store


def cold_start_embed(x, params, *, block_rows=1024):
    """ColdStartEmbed forward pass (TowerModel MLP) as one tiled Pallas call.

    x: [batch, input_dim] float32
    params: dict with w1 (in,h), b1 (1,h), w2 (h,h), b2 (1,h), w3 (h,e), b3 (1,e)
    returns: [batch, embed_dim] float32
    """
    batch, input_dim = x.shape
    hidden_dim = params["w1"].shape[1]
    embed_dim = params["w3"].shape[1]

    # Lane-dense output width (multiple of 128); extra columns are zero and
    # sliced off below — layout plumbing only.
    n3 = max(128, ((embed_dim + 127) // 128) * 128)

    compute_dtype = jnp.bfloat16
    xb = x.astype(compute_dtype)
    w1 = params["w1"].astype(compute_dtype)
    w2 = params["w2"].astype(compute_dtype)
    w3 = params["w3"].astype(compute_dtype)
    b1 = params["b1"].astype(jnp.float32)
    b2 = params["b2"].astype(jnp.float32)
    b3 = params["b3"].astype(jnp.float32)
    if n3 != embed_dim:
        w3 = jnp.pad(w3, ((0, 0), (0, n3 - embed_dim)))
        b3 = jnp.pad(b3, ((0, 0), (0, n3 - embed_dim)))

    # Batch tile: large to amortize per-step overhead, multiple of 8 (sublane),
    # capped at the (padded) batch so tiny batches still compile.
    tm = min(block_rows, max(8, ((batch + 7) // 8) * 8))
    batch_padded = ((batch + tm - 1) // tm) * tm
    if batch_padded != batch:
        xb = jnp.pad(xb, ((0, batch_padded - batch), (0, 0)))

    grid = (batch_padded // tm,)
    const2 = lambda i: (0, 0)  # weights / biases: resident, never re-indexed

    flops = 2 * batch_padded * (input_dim * hidden_dim
                                + hidden_dim * hidden_dim
                                + hidden_dim * n3)
    bytes_accessed = int(xb.size * 2                      # bf16 x stream
                         + (w1.size + w2.size + w3.size) * 2
                         + (b1.size + b2.size + b3.size) * 4
                         + batch_padded * n3 * 4)         # f32 output stream

    out_padded = pl.pallas_call(
        _tower_kernel,
        out_shape=jax.ShapeDtypeStruct((batch_padded, n3), jnp.float32),
        grid=grid,
        in_specs=[
            pl.BlockSpec((tm, input_dim), lambda i: (i, 0)),   # x: batch-tiled
            pl.BlockSpec(w1.shape, const2),
            pl.BlockSpec(b1.shape, const2),
            pl.BlockSpec(w2.shape, const2),
            pl.BlockSpec(b2.shape, const2),
            pl.BlockSpec(w3.shape, const2),
            pl.BlockSpec(b3.shape, const2),
        ],
        out_specs=pl.BlockSpec((tm, n3), lambda i: (i, 0)),
        compiler_params=pltpu.CompilerParams(
            dimension_semantics=("parallel",),      # megacore sharding on v7x
            vmem_limit_bytes=32 * 1024 * 1024,      # explicit, safe on v5e/v6e/v7x
        ),
        cost_estimate=pl.CostEstimate(
            flops=flops, transcendentals=0, bytes_accessed=bytes_accessed),
    )(xb, w1, b1, w2, b2, w3, b3)

    return out_padded[:batch, :embed_dim]


def init_params(key, input_dim, hidden_dim, embed_dim):
    """Deterministic synthetic weight init (stands in for init_weights)."""
    k1, k2, k3 = jax.random.split(key, 3)
    scale = lambda fan_in: 1.0 / jnp.sqrt(jnp.float32(fan_in))
    return {
        "w1": jax.random.normal(k1, (input_dim, hidden_dim), jnp.float32) * scale(input_dim),
        "b1": jnp.zeros((1, hidden_dim), jnp.float32),
        "w2": jax.random.normal(k2, (hidden_dim, hidden_dim), jnp.float32) * scale(hidden_dim),
        "b2": jnp.zeros((1, hidden_dim), jnp.float32),
        "w3": jax.random.normal(k3, (hidden_dim, embed_dim), jnp.float32) * scale(hidden_dim),
        "b3": jnp.zeros((1, embed_dim), jnp.float32),
    }


def _reference(x, p):
    """JAX reference with the same precision policy as the kernel
    (bf16 operands, f32 accumulation, f32 bias/ReLU)."""
    cd = jnp.bfloat16
    h1 = jnp.dot(x.astype(cd), p["w1"].astype(cd),
                 preferred_element_type=jnp.float32) + p["b1"]
    h1 = jnp.maximum(h1, 0.0)
    h2 = jnp.dot(h1.astype(cd), p["w2"].astype(cd),
                 preferred_element_type=jnp.float32) + p["b2"]
    h2 = jnp.maximum(h2, 0.0)
    return jnp.dot(h2.astype(cd), p["w3"].astype(cd),
                   preferred_element_type=jnp.float32) + p["b3"]


if __name__ == "__main__":
    # Small shapes consistent with a 'user' tower: u_input_dim=32, hidden=64, embed=16.
    batch, input_dim, hidden_dim, embed_dim = 8, 32, 64, 16

    key = jax.random.PRNGKey(0)
    kx, kp = jax.random.split(key)
    x = jax.random.normal(kx, (batch, input_dim), jnp.float32)
    params = init_params(kp, input_dim, hidden_dim, embed_dim)

    out = cold_start_embed(x, params)
    out = jax.block_until_ready(out)

    ref = _reference(x, params)
    assert out.shape == (batch, embed_dim)
    assert jnp.allclose(out, ref, atol=1e-3, rtol=1e-3), "mismatch vs JAX reference"
    print("KERNEL_OK")
</pallas_src>

<mosaic_0001>
module attributes {stable_mosaic.version = 11 : i64} {
  func.func @_tower_kernel(%arg0: i32, %arg1: memref<8x32xbf16, #tpu.memory_space<vmem>>, %arg2: memref<32x64xbf16, #tpu.memory_space<vmem>>, %arg3: memref<1x64xf32, #tpu.memory_space<vmem>>, %arg4: memref<64x64xbf16, #tpu.memory_space<vmem>>, %arg5: memref<1x64xf32, #tpu.memory_space<vmem>>, %arg6: memref<64x128xbf16, #tpu.memory_space<vmem>>, %arg7: memref<1x128xf32, #tpu.memory_space<vmem>>, %arg8: memref<8x128xf32, #tpu.memory_space<vmem>>) attributes {dimension_semantics = [#tpu.dimension_semantics<parallel>], iteration_bounds = array<i64: 1>, scalar_prefetch = 0 : i64, scratch_operands = 0 : i64, tpu.core_type = #tpu.core_type<tc>, window_params = [{transform_indices = @transform_0, window_bounds = array<i64: 8, 32>}, {pipeline_mode = #tpu.pipeline_mode<synchronous>, transform_indices = @transform_1, window_bounds = array<i64: 32, 64>}, {pipeline_mode = #tpu.pipeline_mode<synchronous>, transform_indices = @transform_2, window_bounds = array<i64: 1, 64>}, {pipeline_mode = #tpu.pipeline_mode<synchronous>, transform_indices = @transform_3, window_bounds = array<i64: 64, 64>}, {pipeline_mode = #tpu.pipeline_mode<synchronous>, transform_indices = @transform_4, window_bounds = array<i64: 1, 64>}, {pipeline_mode = #tpu.pipeline_mode<synchronous>, transform_indices = @transform_5, window_bounds = array<i64: 64, 128>}, {pipeline_mode = #tpu.pipeline_mode<synchronous>, transform_indices = @transform_6, window_bounds = array<i64: 1, 128>}, {transform_indices = @transform_7, window_bounds = array<i64: 8, 128>}]} {
    %c0 = arith.constant 0 : index
    %c0_0 = arith.constant 0 : index
    %0 = vector.load %arg1[%c0, %c0_0] : memref<8x32xbf16, #tpu.memory_space<vmem>>, vector<8x32xbf16>
    %c0_1 = arith.constant 0 : index
    %c0_2 = arith.constant 0 : index
    %1 = vector.load %arg2[%c0_1, %c0_2] : memref<32x64xbf16, #tpu.memory_space<vmem>>, vector<32x64xbf16>
    %cst = arith.constant dense<0.000000e+00> : vector<8x64xf32>
    %2 = tpu.matmul %0, %1, %cst {dimension_numbers = #tpu.dot_dimension_numbers<[1], [0], [0], [1], [0, 0, 1, 1], [], []>} : vector<8x32xbf16>, vector<32x64xbf16>, vector<8x64xf32> -> vector<8x64xf32>
    %c0_3 = arith.constant 0 : index
    %c0_4 = arith.constant 0 : index
    %3 = vector.load %arg3[%c0_3, %c0_4] : memref<1x64xf32, #tpu.memory_space<vmem>>, vector<1x64xf32>
    %4 = vector.broadcast %3 : vector<1x64xf32> to vector<8x64xf32>
    %5 = arith.addf %2, %4 : vector<8x64xf32>
    %cst_5 = arith.constant 0.000000e+00 : f32
    %6 = vector.broadcast %cst_5 : f32 to vector<8x64xf32>
    %7 = arith.maximumf %5, %6 : vector<8x64xf32>
    %8 = arith.truncf %7 : vector<8x64xf32> to vector<8x64xbf16>
    %c0_6 = arith.constant 0 : index
    %c0_7 = arith.constant 0 : index
    %9 = vector.load %arg4[%c0_6, %c0_7] : memref<64x64xbf16, #tpu.memory_space<vmem>>, vector<64x64xbf16>
    %cst_8 = arith.constant dense<0.000000e+00> : vector<8x64xf32>
    %10 = tpu.matmul %8, %9, %cst_8 {dimension_numbers = #tpu.dot_dimension_numbers<[1], [0], [0], [1], [0, 0, 1, 1], [], []>} : vector<8x64xbf16>, vector<64x64xbf16>, vector<8x64xf32> -> vector<8x64xf32>
    %c0_9 = arith.constant 0 : index
    %c0_10 = arith.constant 0 : index
    %11 = vector.load %arg5[%c0_9, %c0_10] : memref<1x64xf32, #tpu.memory_space<vmem>>, vector<1x64xf32>
    %12 = vector.broadcast %11 : vector<1x64xf32> to vector<8x64xf32>
    %13 = arith.addf %10, %12 : vector<8x64xf32>
    %cst_11 = arith.constant 0.000000e+00 : f32
    %14 = vector.broadcast %cst_11 : f32 to vector<8x64xf32>
    %15 = arith.maximumf %13, %14 : vector<8x64xf32>
    %16 = arith.truncf %15 : vector<8x64xf32> to vector<8x64xbf16>
    %c0_12 = arith.constant 0 : index
    %c0_13 = arith.constant 0 : index
    %17 = vector.load %arg6[%c0_12, %c0_13] : memref<64x128xbf16, #tpu.memory_space<vmem>>, vector<64x128xbf16>
    %cst_14 = arith.constant dense<0.000000e+00> : vector<8x128xf32>
    %18 = tpu.matmul %16, %17, %cst_14 {dimension_numbers = #tpu.dot_dimension_numbers<[1], [0], [0], [1], [0, 0, 1, 1], [], []>} : vector<8x64xbf16>, vector<64x128xbf16>, vector<8x128xf32> -> vector<8x128xf32>
    %c0_15 = arith.constant 0 : index
    %c0_16 = arith.constant 0 : index
    %19 = vector.load %arg7[%c0_15, %c0_16] : memref<1x128xf32, #tpu.memory_space<vmem>>, vector<1x128xf32>
    %20 = vector.broadcast %19 : vector<1x128xf32> to vector<8x128xf32>
    %21 = arith.addf %18, %20 : vector<8x128xf32>
    %c0_17 = arith.constant 0 : index
    %c0_18 = arith.constant 0 : index
    %22 = vector.load %arg8[%c0_17, %c0_18] : memref<8x128xf32, #tpu.memory_space<vmem>>, vector<8x128xf32>
    tpu.vector_store %arg8[%c0_17, %c0_18], %21 {strides = array<i32>} : memref<8x128xf32, #tpu.memory_space<vmem>>, vector<8x128xf32>,
    return
  }
  func.func @transform_0(%arg0: i32) -> (i32, i32) {
    %c0_i32 = arith.constant 0 : i32
    %c0_i32_0 = arith.constant 0 : i32
    return %arg0, %c0_i32 : i32, i32
  }
  func.func @transform_1(%arg0: i32) -> (i32, i32) {
    %c0_i32 = arith.constant 0 : i32
    %c0_i32_0 = arith.constant 0 : i32
    %c0_i32_1 = arith.constant 0 : i32
    return %c0_i32, %c0_i32_0 : i32, i32
  }
  func.func @transform_2(%arg0: i32) -> (i32, i32) {
    %c0_i32 = arith.constant 0 : i32
    %c0_i32_0 = arith.constant 0 : i32
    %c0_i32_1 = arith.constant 0 : i32
    return %c0_i32, %c0_i32_0 : i32, i32
  }
  func.func @transform_3(%arg0: i32) -> (i32, i32) {
    %c0_i32 = arith.constant 0 : i32
    %c0_i32_0 = arith.constant 0 : i32
    %c0_i32_1 = arith.constant 0 : i32
    return %c0_i32, %c0_i32_0 : i32, i32
  }
  func.func @transform_4(%arg0: i32) -> (i32, i32) {
    %c0_i32 = arith.constant 0 : i32
    %c0_i32_0 = arith.constant 0 : i32
    %c0_i32_1 = arith.constant 0 : i32
    return %c0_i32, %c0_i32_0 : i32, i32
  }
  func.func @transform_5(%arg0: i32) -> (i32, i32) {
    %c0_i32 = arith.constant 0 : i32
    %c0_i32_0 = arith.constant 0 : i32
    %c0_i32_1 = arith.constant 0 : i32
    return %c0_i32, %c0_i32_0 : i32, i32
  }
  func.func @transform_6(%arg0: i32) -> (i32, i32) {
    %c0_i32 = arith.constant 0 : i32
    %c0_i32_0 = arith.constant 0 : i32
    %c0_i32_1 = arith.constant 0 : i32
    return %c0_i32, %c0_i32_0 : i32, i32
  }
  func.func @transform_7(%arg0: i32) -> (i32, i32) {
    %c0_i32 = arith.constant 0 : i32
    %c0_i32_0 = arith.constant 0 : i32
    return %arg0, %c0_i32 : i32, i32
  }
}

</mosaic_0001>

<llo_original>
// kernel: tpu_custom_call.1
$region0: #{tpu_custom_call.1}
  #allocation0 [shape = 'u32[]', space=smem, size = 0x4, offset = 0x4, fixed_abs, tag = 'smem constant byte address 0x4 - core index']
  #allocation1 [shape = 'u32[72,128]{1,0:T(1,128)}', space=vmem, size = 0x9000, scoped, tag = 'internal scratch']
  %s0 = inlined_call_operand.hbm [shape: bf16[8,32], index: 0, kind: input, shape index: {}]
  %s1 = inlined_call_operand.hbm [shape: bf16[32,64], index: 1, kind: input, shape index: {}]
  %s2 = inlined_call_operand.vmem [shape: f32[1,64], index: 2, kind: input, shape index: {}]
  %s3 = inlined_call_operand.hbm [shape: bf16[64,64], index: 3, kind: input, shape index: {}]
  %s4 = inlined_call_operand.vmem [shape: f32[1,64], index: 4, kind: input, shape index: {}]
  %s5 = inlined_call_operand.hbm [shape: bf16[64,128], index: 5, kind: input, shape index: {}]
  %s6 = inlined_call_operand.vmem [shape: f32[1,128], index: 6, kind: input, shape index: {}]
  %s7 = inlined_call_operand.hbm [shape: f32[8,128], index: 7, kind: output, shape index: {}]
  %s8 = sld [smem:[#allocation0]]
  $region54: #{tpu_custom_call.1} parent=0
    _
  %s10 = ssub.s32 1, %s8
  %s11 = scalar_select 0, %s10, %s8
  $region1: #{tpu_custom_call.1} parent=0
    #allocation2 [shape = 'u8[2048]{0}', space=vmem, size = 0x800, scoped, tag = 'input window, operand 0, single buffered']
    #allocation3 [shape = 's32[1]{0}', space=sflag, size = 0x4, scoped, tag = 'scoped memory for tpu_custom_call.1']
    #allocation4 [shape = 's32[1]{0}', space=sflag, size = 0x4, scoped, tag = 'scoped memory for tpu_custom_call.1']
    #allocation5 [shape = 'u8[8192]{0}', space=vmem, size = 0x2000, scoped, tag = 'input window, operand 1, single buffered']
    #allocation6 [shape = 's32[1]{0}', space=sflag, size = 0x4, scoped, tag = 'scoped memory for tpu_custom_call.1']
    #allocation7 [shape = 'u8[16384]{0}', space=vmem, size = 0x4000, scoped, tag = 'input window, operand 3, single buffered']
    #allocation8 [shape = 'u8[16384]{0}', space=vmem, size = 0x4000, scoped, tag = 'input window, operand 5, single buffered']
    #allocation9 [shape = 's32[1]{0}', space=sflag, size = 0x4, scoped, tag = 'scoped memory for tpu_custom_call.1']
    #allocation10 [shape = 'u8[4096]{0}', space=vmem, size = 0x1000, scoped, tag = 'output window, operand 0, single buffered']
    %12 = vsyncpa [#allocation3], 0
    %13 = vsyncpa [#allocation6], 0
    %14 = vsyncpa [#allocation9], 0
    %15 = vsyncpa [#allocation4], 0
    // Predicated region
    $region2: #{tpu_custom_call.1} parent=1 // pred_check
      _
    $region3: #{tpu_custom_call.1} parent=1 // pred_check_branch
      %17 = sbr.rel (0) target = $region5
    $region4: #{tpu_custom_call.1} parent=1 // pred_region
      %19 = vsyncadd [#allocation3], 0
      %s21 = sshll.u32 %s0, 4
      %s22 = int_to_ptr.hbm [resolvable:$true] %s21
      %s23 = sshll.u32 [#allocation2], 4
      %s24 = int_to_ptr.vmem [resolvable:$true] %s23
      %26 = dma.hbm_to_vmem [thread:$0]  %s22, 64, %s24, [#allocation3]
    $region5: #{tpu_custom_call.1} parent=1 // pred_fallthru
      _
    // Predicated region
    $region6: #{tpu_custom_call.1} parent=1 // pred_check
      _
    $region7: #{tpu_custom_call.1} parent=1 // pred_check_branch
      %28 = sbr.rel (0) target = $region9
    $region8: #{tpu_custom_call.1} parent=1 // pred_region
      %30 = vsyncadd [#allocation6], 0
      %s31 = sshll.u32 %s1, 4
      %s32 = int_to_ptr.hbm [resolvable:$true] %s31
      %s33 = sshll.u32 [#allocation5], 4
      %s34 = int_to_ptr.vmem [resolvable:$true] %s33
      %39 = dma.hbm_to_vmem [thread:$0]  %s32, 256, %s34, [#allocation6], 64, 64, 4
    $region9: #{tpu_custom_call.1} parent=1 // pred_fallthru
      _
    // Predicated region
    $region10: #{tpu_custom_call.1} parent=1 // pred_check
      _
    $region11: #{tpu_custom_call.1} parent=1 // pred_check_branch
      %41 = sbr.rel (0) target = $region13
    $region12: #{tpu_custom_call.1} parent=1 // pred_region
      _
    $region13: #{tpu_custom_call.1} parent=1 // pred_fallthru
      _
    // Predicated region
    $region14: #{tpu_custom_call.1} parent=1 // pred_check
      _
    $region15: #{tpu_custom_call.1} parent=1 // pred_check_branch
      %43 = sbr.rel (0) target = $region17
    $region16: #{tpu_custom_call.1} parent=1 // pred_region
      %45 = vsyncadd [#allocation6], 0
      %s46 = sshll.u32 %s3, 4
      %s47 = int_to_ptr.hbm [resolvable:$true] %s46
      %s48 = sshll.u32 [#allocation7], 4
      %s49 = int_to_ptr.vmem [resolvable:$true] %s48
      %54 = dma.hbm_to_vmem [thread:$0]  %s47, 512, %s49, [#allocation6], 64, 64, 4
    $region17: #{tpu_custom_call.1} parent=1 // pred_fallthru
      _
    // Predicated region
    $region18: #{tpu_custom_call.1} parent=1 // pred_check
      _
    $region19: #{tpu_custom_call.1} parent=1 // pred_check_branch
      %56 = sbr.rel (0) target = $region21
    $region20: #{tpu_custom_call.1} parent=1 // pred_region
      _
    $region21: #{tpu_custom_call.1} parent=1 // pred_fallthru
      _
    // Predicated region
    $region22: #{tpu_custom_call.1} parent=1 // pred_check
      _
    $region23: #{tpu_custom_call.1} parent=1 // pred_check_branch
      %58 = sbr.rel (0) target = $region25
    $region24: #{tpu_custom_call.1} parent=1 // pred_region
      %60 = vsyncadd [#allocation9], 0
      %s61 = sshll.u32 %s5, 4
      %s62 = int_to_ptr.hbm [resolvable:$true] %s61
      %s63 = sshll.u32 [#allocation8], 4
      %s64 = int_to_ptr.vmem [resolvable:$true] %s63
      %69 = dma.hbm_to_vmem [thread:$0]  %s62, 512, %s64, [#allocation9], 64, 64, 4
    $region25: #{tpu_custom_call.1} parent=1 // pred_fallthru
      _
    // Predicated region
    $region26: #{tpu_custom_call.1} parent=1 // pred_check
      _
    $region27: #{tpu_custom_call.1} parent=1 // pred_check_branch
      %71 = sbr.rel (0) target = $region29
    $region28: #{tpu_custom_call.1} parent=1 // pred_region
      _
    $region29: #{tpu_custom_call.1} parent=1 // pred_fallthru
      _
    // Predicated region
    $region30: #{tpu_custom_call.1} parent=1 // pred_check
      _
    $region31: #{tpu_custom_call.1} parent=1 // pred_check_branch
      %73 = sbr.rel (0) target = $region33
    $region32: #{tpu_custom_call.1} parent=1 // pred_region
      %75 = dma.done [#allocation3], 64
    $region33: #{tpu_custom_call.1} parent=1 // pred_fallthru
      _
    // Predicated region
    $region34: #{tpu_custom_call.1} parent=1 // pred_check
      _
    $region35: #{tpu_custom_call.1} parent=1 // pred_check_branch
      %77 = sbr.rel (0) target = $region37
    $region36: #{tpu_custom_call.1} parent=1 // pred_region
      %79 = dma.done [#allocation6], 256
    $region37: #{tpu_custom_call.1} parent=1 // pred_fallthru
      _
    // Predicated region
    $region38: #{tpu_custom_call.1} parent=1 // pred_check
      _
    $region39: #{tpu_custom_call.1} parent=1 // pred_check_branch
      %81 = sbr.rel (0) target = $region41
    $region40: #{tpu_custom_call.1} parent=1 // pred_region
      %83 = dma.done [#allocation6], 512
    $region41: #{tpu_custom_call.1} parent=1 // pred_fallthru
      _
    // Predicated region
    $region42: #{tpu_custom_call.1} parent=1 // pred_check
      _
    $region43: #{tpu_custom_call.1} parent=1 // pred_check_branch
      %85 = sbr.rel (0) target = $region45
    $region44: #{tpu_custom_call.1} parent=1 // pred_region
      %87 = dma.done [#allocation9], 512
    $region45: #{tpu_custom_call.1} parent=1 // pred_fallthru
      _
    %v89 = vld [vmem:[#allocation2] sm:$0xf]
    %v90 = vld [vmem:[#allocation5] sm:$0xf]
    %v91 = vld [vmem:[#allocation5 + $0x4] sm:$0xf]
    %v92 = vld [vmem:[#allocation5 + $0x8] sm:$0xf]
    %v93 = vld [vmem:[#allocation5 + $0xc] sm:$0xf]
    %v94 = vld [vmem:[%s2] sm:$0x1]
    %v96 = vperm.slane %v94, 0
    %v102 = vunpack.c.l.b16 %v90
    %v103 = vunpack.c.l.b16 %v91
    %v104 = vunpack.c.l.b16 %v92
    %v105 = vunpack.c.l.b16 %v93
    %v106 = vpack.c.b16 %v103, %v102
    %v107 = vpack.c.b16 %v105, %v104
    %vm110 = vcmask 261120
    %v112 = vsel %vm110, %v89, 0
    %114 = vmatpush.bf16.msra.mxu0 0
    %115 = vmatpush.bf16.msra.mxu0 0
    %116 = vmatpush.bf16.msra.mxu0 0
    %117 = vmatpush.bf16.msra.mxu0 0
    %118 = vmatpush.bf16.msra.mxu0 0
    %119 = vmatpush.bf16.msra.mxu0 0
    %120 = vmatpush.bf16.msra.mxu0 %v107
    %121 = vmatpush.bf16.msra.mxu0 %v106
    %122 = vmatmul.bf16.gmra.mxu0 %v112
    %v123 = vpop.f32.mrf.mxu0
    %v124 = vadd.f32 %v96, %v123
    %v125 = vpop.f32.mrf.mxu0
    %126 = vdwg.mxu0
    %v127 = vmax.f32 %v124, 0.0
    %v128 = vpack.c.bf16 %v127, %v127
    %v129 = vld [vmem:[#allocation7] sm:$0xf]
    %v130 = vld [vmem:[#allocation7 + $0x4] sm:$0xf]
    %v131 = vld [vmem:[#allocation7 + $0x8] sm:$0xf]
    %v132 = vld [vmem:[#allocation7 + $0xc] sm:$0xf]
    %v133 = vld [vmem:[#allocation7 + $0x10] sm:$0xf]
    %v134 = vld [vmem:[#allocation7 + $0x14] sm:$0xf]
    %v135 = vld [vmem:[#allocation7 + $0x18] sm:$0xf]
    %v136 = vld [vmem:[#allocation7 + $0x1c] sm:$0xf]
    %v137 = vld [vmem:[%s4] sm:$0x1]
    %v139 = vperm.slane %v137, 0
    %v149 = vunpack.c.l.b16 %v129
    %v150 = vunpack.c.l.b16 %v130
    %v151 = vunpack.c.l.b16 %v131
    %v152 = vunpack.c.l.b16 %v132
    %v153 = vunpack.c.l.b16 %v133
    %v154 = vunpack.c.l.b16 %v134
    %v155 = vunpack.c.l.b16 %v135
    %v156 = vunpack.c.l.b16 %v136
    %v157 = vpack.c.b16 %v150, %v149
    %v158 = vpack.c.b16 %v152, %v151
    %v159 = vpack.c.b16 %v154, %v153
    %v160 = vpack.c.b16 %v156, %v155
    %vm165 = vcmask 523264
    %v167 = vsel %vm165, %v128, 0
    %169 = vmatpush.bf16.msra.mxu0 0
    %170 = vmatpush.bf16.msra.mxu0 0
    %171 = vmatpush.bf16.msra.mxu0 0
    %172 = vmatpush.bf16.msra.mxu0 0
    %173 = vmatpush.bf16.msra.mxu0 %v160
    %174 = vmatpush.bf16.msra.mxu0 %v159
    %175 = vmatpush.bf16.msra.mxu0 %v158
    %176 = vmatpush.bf16.msra.mxu0 %v157
    %177 = vmatmul.bf16.gmra.mxu0 %v167
    %v178 = vpop.f32.mrf.mxu0
    %v179 = vadd.f32 %v139, %v178
    %v180 = vpop.f32.mrf.mxu0
    %181 = vdwg.mxu0
    %v182 = vmax.f32 %v179, 0.0
    %v183 = vpack.c.bf16 %v182, %v182
    %v184 = vld [vmem:[#allocation8] sm:$0xf]
    %v185 = vld [vmem:[#allocation8 + $0x4] sm:$0xf]
    %v186 = vld [vmem:[#allocation8 + $0x8] sm:$0xf]
    %v187 = vld [vmem:[#allocation8 + $0xc] sm:$0xf]
    %v188 = vld [vmem:[#allocation8 + $0x10] sm:$0xf]
    %v189 = vld [vmem:[#allocation8 + $0x14] sm:$0xf]
    %v190 = vld [vmem:[#allocation8 + $0x18] sm:$0xf]
    %v191 = vld [vmem:[#allocation8 + $0x1c] sm:$0xf]
    %v192 = vld [vmem:[%s6] sm:$0x1]
    %v194 = vperm.slane %v192, 0
    %v204 = vunpack.c.l.b16 %v184
    %v205 = vunpack.c.l.b16 %v185
    %v206 = vunpack.c.l.b16 %v186
    %v207 = vunpack.c.l.b16 %v187
    %v208 = vunpack.c.l.b16 %v188
    %v209 = vunpack.c.l.b16 %v189
    %v210 = vunpack.c.l.b16 %v190
    %v211 = vunpack.c.l.b16 %v191
    %v212 = vpack.c.b16 %v205, %v204
    %v213 = vpack.c.b16 %v207, %v206
    %v214 = vpack.c.b16 %v209, %v208
    %v215 = vpack.c.b16 %v211, %v210
    %v221 = vsel %vm165, %v183, 0
    %223 = vmatpush.bf16.msra.mxu0 0
    %224 = vmatpush.bf16.msra.mxu0 0
    %225 = vmatpush.bf16.msra.mxu0 0
    %226 = vmatpush.bf16.msra.mxu0 0
    %227 = vmatpush.bf16.msra.mxu0 %v215
    %228 = vmatpush.bf16.msra.mxu0 %v214
    %229 = vmatpush.bf16.msra.mxu0 %v213
    %230 = vmatpush.bf16.msra.mxu0 %v212
    %231 = vmatmul.bf16.gmra.mxu0 %v221
    %v232 = vpop.f32.mrf.mxu0
    %v233 = vadd.f32 %v194, %v232
    %v234 = vpop.f32.mrf.mxu0
    %235 = vdwg.mxu0
    %236 = vst [vmem:[#allocation10] sm:$0xff] %v233
    // Predicated region
    $region46: #{tpu_custom_call.1} parent=1 // pred_check
      _
    $region47: #{tpu_custom_call.1} parent=1 // pred_check_branch
      %238 = sbr.rel (0) target = $region49
    $region48: #{tpu_custom_call.1} parent=1 // pred_region
      %240 = vsyncadd [#allocation4], 0
      %s242 = sshll.u32 [#allocation10], 4
      %s243 = int_to_ptr.vmem [resolvable:$true] %s242
      %s244 = sshll.u32 %s7, 4
      %s245 = int_to_ptr.hbm [resolvable:$true] %s244
      %247 = dma.vmem_to_hbm [thread:$0]  %s243, 128, %s245, [#allocation4]
    $region49: #{tpu_custom_call.1} parent=1 // pred_fallthru
      _
    // Predicated region
    $region50: #{tpu_custom_call.1} parent=1 // pred_check
      _
    $region51: #{tpu_custom_call.1} parent=1 // pred_check_branch
      %249 = sbr.rel (0) target = $region53
    $region52: #{tpu_custom_call.1} parent=1 // pred_region
      %251 = dma.done [#allocation4], 128
    $region53: #{tpu_custom_call.1} parent=1 // pred_fallthru
      _
    %252 = vsyncpa [#allocation3], 1
    %253 = vsyncpa [#allocation6], 1
    %254 = vsyncpa [#allocation9], 1
    %255 = vsyncpa [#allocation4], 1

</llo_original>
